<compile_context>
chip_gen: v7x
topology: tpu7x:2x2x1
jax: 0.10.0
libtpu: 0.0.40
codegen_flags: <defaults>
</compile_context>

<pallas_src>
import jax
import jax.numpy as jnp
from jax.experimental import pallas as pl
from jax.experimental.pallas import tpu as pltpu

INPUT_SIZE = 10
NUM_CLASSES = 2

PACK = 8                        # batch rows packed into one lane-row (sublane factor)
TILE_B_DEFAULT = 32768          # logical batch rows per grid step (=> 4096 packed rows)
VMEM_LIMIT_BYTES = 32 * 1024 * 1024


def linear_kernel(x_ref, w_ref, b_ref, o_ref):
    # x_ref : (tbp, PACK*D)   packed batch tile (streamed)
    # w_ref : (PACK*D, PACK*C) block-diagonal expanded weight, VMEM-resident
    # b_ref : (1, PACK*C)     packed bias (f32), VMEM-resident
    # o_ref : (tbp, PACK*C)   packed output tile; row-major flatten == (tile_b, C)
    acc = jnp.dot(x_ref[...], w_ref[...].astype(x_ref.dtype),
                  preferred_element_type=jnp.float32)
    o_ref[...] = (acc + b_ref[...]).astype(o_ref.dtype)


def linear_classifier_forward(x, weight, bias, *, tile_b=TILE_B_DEFAULT):
    """x: (B, D); weight: (C, D) (torch nn.Linear layout); bias: (C,)."""
    B, D = x.shape
    C, D_w = weight.shape
    assert D == D_w
    out_dtype = x.dtype

    # Pad the batch to a multiple of PACK so the packing reshape is valid.
    # Zero pad rows produce bias-only rows which are sliced off at the end.
    B_pad = ((B + PACK - 1) // PACK) * PACK
    if B_pad != B:
        x = jnp.pad(x, ((0, B_pad - B), (0, 0)))
    R = B_pad // PACK            # packed rows
    Dp = PACK * D                # 80 packed feature lanes
    Cp = PACK * C                # 16 packed output lanes

    # Free row-major reshape: x_p[r, D*j + k] == x[PACK*r + j, k].
    x_p = x.reshape(R, Dp)

    # Block-diagonal expanded weight (tiny, built once):
    #   Wt[D*j + k, C*J + c] = (j == J) * weight[c, k]
    # so x_p @ Wt gives the packed output directly (no output transpose needed).
    w = weight.astype(x.dtype)
    Wt = jnp.kron(jnp.eye(PACK, dtype=w.dtype), w).T          # (Dp, Cp)
    b_p = jnp.tile(bias.astype(jnp.float32), PACK).reshape(1, Cp)

    # Packed-row tile: a multiple of 8 (sublane rule) or the full extent.
    tbp = min(R, max(1, tile_b // PACK))
    if tbp < R:
        tbp = max(8, (tbp // 8) * 8)
    grid = (pl.cdiv(R, tbp),)

    bytes_accessed = (B_pad * D * x.dtype.itemsize
                      + Dp * Cp * Wt.dtype.itemsize
                      + Cp * b_p.dtype.itemsize
                      + B_pad * C * jnp.dtype(out_dtype).itemsize)

    out_p = pl.pallas_call(
        linear_kernel,
        out_shape=jax.ShapeDtypeStruct((R, Cp), out_dtype),
        grid_spec=pltpu.PrefetchScalarGridSpec(
            num_scalar_prefetch=0,
            grid=grid,
            in_specs=[
                pl.BlockSpec((tbp, Dp), lambda i: (i, 0)),   # streamed packed batch
                pl.BlockSpec((Dp, Cp), lambda i: (0, 0)),    # resident weight
                pl.BlockSpec((1, Cp), lambda i: (0, 0)),     # resident bias
            ],
            out_specs=pl.BlockSpec((tbp, Cp), lambda i: (i, 0)),
        ),
        compiler_params=pltpu.CompilerParams(
            dimension_semantics=("parallel",),               # v7x: split tiles over 2 TCs
            vmem_limit_bytes=VMEM_LIMIT_BYTES),
        cost_estimate=pl.CostEstimate(
            flops=2 * B_pad * D * C,
            transcendentals=0,
            bytes_accessed=bytes_accessed),
    )(x_p, Wt, b_p)

    # Free row-major reshape (R, PACK*C) -> (B_pad, C); drop the pad rows.
    return out_p.reshape(B_pad, C)[:B]


if __name__ == "__main__":
    key = jax.random.PRNGKey(0)
    kx, kw, kb = jax.random.split(key, 3)

    batch = 8
    # Deterministic init mimicking nn.Linear's U(-1/sqrt(fan_in), 1/sqrt(fan_in)).
    bound = 1.0 / jnp.sqrt(jnp.float32(INPUT_SIZE))
    weight = jax.random.uniform(kw, (NUM_CLASSES, INPUT_SIZE), jnp.float32,
                                minval=-bound, maxval=bound)
    bias = jax.random.uniform(kb, (NUM_CLASSES,), jnp.float32,
                              minval=-bound, maxval=bound)
    x = jax.random.normal(kx, (batch, INPUT_SIZE), jnp.float32)

    out = linear_classifier_forward(x, weight, bias)
    out = jax.block_until_ready(out)

    # Reference check against plain JAX (same math as torch nn.Linear forward).
    ref = x @ weight.T + bias
    assert out.shape == (batch, NUM_CLASSES)
    assert jnp.allclose(out, ref, atol=1e-5, rtol=1e-5)
    print("KERNEL_OK")
</pallas_src>

<mosaic_0001>
module attributes {stable_mosaic.version = 11 : i64} {
  func.func @linear_kernel(%arg0: i32, %arg1: memref<1x80xf32, #tpu.memory_space<vmem>>, %arg2: memref<80x16xf32, #tpu.memory_space<vmem>>, %arg3: memref<1x16xf32, #tpu.memory_space<vmem>>, %arg4: memref<1x16xf32, #tpu.memory_space<vmem>>) attributes {dimension_semantics = [#tpu.dimension_semantics<parallel>], iteration_bounds = array<i64: 1>, scalar_prefetch = 0 : i64, scratch_operands = 0 : i64, tpu.core_type = #tpu.core_type<tc>, window_params = [{transform_indices = @transform_0, window_bounds = array<i64: 1, 80>}, {pipeline_mode = #tpu.pipeline_mode<synchronous>, transform_indices = @transform_1, window_bounds = array<i64: 80, 16>}, {pipeline_mode = #tpu.pipeline_mode<synchronous>, transform_indices = @transform_2, window_bounds = array<i64: 1, 16>}, {transform_indices = @transform_3, window_bounds = array<i64: 1, 16>}]} {
    %c0 = arith.constant 0 : index
    %c0_0 = arith.constant 0 : index
    %0 = vector.load %arg1[%c0, %c0_0] : memref<1x80xf32, #tpu.memory_space<vmem>>, vector<1x80xf32>
    %c0_1 = arith.constant 0 : index
    %c0_2 = arith.constant 0 : index
    %1 = vector.load %arg2[%c0_1, %c0_2] : memref<80x16xf32, #tpu.memory_space<vmem>>, vector<80x16xf32>
    %cst = arith.constant dense<0.000000e+00> : vector<1x16xf32>
    %2 = tpu.matmul %0, %1, %cst {dimension_numbers = #tpu.dot_dimension_numbers<[1], [0], [0], [1], [0, 0, 1, 1], [], []>} : vector<1x80xf32>, vector<80x16xf32>, vector<1x16xf32> -> vector<1x16xf32>
    %c0_3 = arith.constant 0 : index
    %c0_4 = arith.constant 0 : index
    %3 = vector.load %arg3[%c0_3, %c0_4] : memref<1x16xf32, #tpu.memory_space<vmem>>, vector<1x16xf32>
    %4 = arith.addf %2, %3 : vector<1x16xf32>
    %c0_5 = arith.constant 0 : index
    %c0_6 = arith.constant 0 : index
    %5 = vector.load %arg4[%c0_5, %c0_6] : memref<1x16xf32, #tpu.memory_space<vmem>>, vector<1x16xf32>
    tpu.vector_store %arg4[%c0_5, %c0_6], %4 {strides = array<i32>} : memref<1x16xf32, #tpu.memory_space<vmem>>, vector<1x16xf32>,
    return
  }
  func.func @transform_0(%arg0: i32) -> (i32, i32) {
    %c0_i32 = arith.constant 0 : i32
    %c0_i32_0 = arith.constant 0 : i32
    return %arg0, %c0_i32 : i32, i32
  }
  func.func @transform_1(%arg0: i32) -> (i32, i32) {
    %c0_i32 = arith.constant 0 : i32
    %c0_i32_0 = arith.constant 0 : i32
    %c0_i32_1 = arith.constant 0 : i32
    return %c0_i32, %c0_i32_0 : i32, i32
  }
  func.func @transform_2(%arg0: i32) -> (i32, i32) {
    %c0_i32 = arith.constant 0 : i32
    %c0_i32_0 = arith.constant 0 : i32
    %c0_i32_1 = arith.constant 0 : i32
    return %c0_i32, %c0_i32_0 : i32, i32
  }
  func.func @transform_3(%arg0: i32) -> (i32, i32) {
    %c0_i32 = arith.constant 0 : i32
    %c0_i32_0 = arith.constant 0 : i32
    return %arg0, %c0_i32 : i32, i32
  }
}

</mosaic_0001>

<llo_original>
// kernel: tpu_custom_call.1
$region0: #{tpu_custom_call.1}
  #allocation0 [shape = 'u32[]', space=smem, size = 0x4, offset = 0x4, fixed_abs, tag = 'smem constant byte address 0x4 - core index']
  #allocation1 [shape = 'u32[144,128]{1,0:T(1,128)}', space=vmem, size = 0x12000, scoped, tag = 'internal scratch']
  %s0 = inlined_call_operand.vmem [shape: f32[1,80], index: 0, kind: input, shape index: {}]
  %s1 = inlined_call_operand.vmem [shape: f32[80,16], index: 1, kind: input, shape index: {}]
  %s2 = inlined_call_operand.vmem [shape: f32[1,16], index: 2, kind: input, shape index: {}]
  %s3 = inlined_call_operand.hbm [shape: f32[1,16], index: 3, kind: output, shape index: {}]
  %s4 = sld [smem:[#allocation0]]
  $region22: #{tpu_custom_call.1} parent=0
    _
  %s6 = ssub.s32 1, %s4
  %s7 = scalar_select 0, %s6, %s4
  $region1: #{tpu_custom_call.1} parent=0
    #allocation2 [shape = 'u8[512]{0}', space=vmem, size = 0x400, scoped, tag = 'output window, operand 0, single buffered']
    #allocation3 [shape = 's32[1]{0}', space=sflag, size = 0x4, scoped, tag = 'scoped memory for tpu_custom_call.1']
    %8 = vsyncpa [#allocation3], 0
    // Predicated region
    $region2: #{tpu_custom_call.1} parent=1 // pred_check
      _
    $region3: #{tpu_custom_call.1} parent=1 // pred_check_branch
      %10 = sbr.rel (0) target = $region5
    $region4: #{tpu_custom_call.1} parent=1 // pred_region
      _
    $region5: #{tpu_custom_call.1} parent=1 // pred_fallthru
      _
    // Predicated region
    $region6: #{tpu_custom_call.1} parent=1 // pred_check
      _
    $region7: #{tpu_custom_call.1} parent=1 // pred_check_branch
      %12 = sbr.rel (0) target = $region9
    $region8: #{tpu_custom_call.1} parent=1 // pred_region
      _
    $region9: #{tpu_custom_call.1} parent=1 // pred_fallthru
      _
    // Predicated region
    $region10: #{tpu_custom_call.1} parent=1 // pred_check
      _
    $region11: #{tpu_custom_call.1} parent=1 // pred_check_branch
      %14 = sbr.rel (0) target = $region13
    $region12: #{tpu_custom_call.1} parent=1 // pred_region
      _
    $region13: #{tpu_custom_call.1} parent=1 // pred_fallthru
      _
    %v15 = vld [vmem:[%s0] sm:$0x1]
    %v16 = vld [vmem:[%s1] sm:$0xff]
    %v17 = vld [vmem:[%s1 + $0x8] sm:$0xff]
    %v18 = vld [vmem:[%s1 + $0x10] sm:$0xff]
    %v19 = vld [vmem:[%s1 + $0x18] sm:$0xff]
    %v20 = vld [vmem:[%s1 + $0x20] sm:$0xff]
    %v21 = vld [vmem:[%s1 + $0x28] sm:$0xff]
    %v22 = vld [vmem:[%s1 + $0x30] sm:$0xff]
    %v23 = vld [vmem:[%s1 + $0x38] sm:$0xff]
    %v24 = vld [vmem:[%s1 + $0x40] sm:$0xff]
    %v25 = vld [vmem:[%s1 + $0x48] sm:$0xff]
    %v26 = vld [vmem:[%s2] sm:$0x1]
    %vm27 = vcmask 654336
    %v29 = vsel %vm27, %v15, 0
    %31 = vmatprep.subr.mxu0 0.0
    %32 = vmatpush1.msra.mxu0 %v16
    %33 = vmatprep.subr.mxu0 0.0
    %34 = vmatpush1.msra.mxu0 %v17
    %35 = vmatprep.subr.mxu0 0.0
    %36 = vmatpush1.msra.mxu0 %v18
    %37 = vmatprep.subr.mxu0 0.0
    %38 = vmatpush1.msra.mxu0 %v19
    %39 = vmatprep.subr.mxu0 0.0
    %40 = vmatpush1.msra.mxu0 %v20
    %41 = vmatprep.subr.mxu0 0.0
    %42 = vmatpush1.msra.mxu0 %v21
    %43 = vmatprep.subr.mxu0 0.0
    %44 = vmatpush1.msra.mxu0 %v22
    %45 = vmatprep.subr.mxu0 0.0
    %46 = vmatpush1.msra.mxu0 %v23
    %47 = vmatprep.subr.mxu0 0.0
    %48 = vmatpush1.msra.mxu0 %v24
    %49 = vmatprep.subr.mxu0 0.0
    %50 = vmatpush1.msra.mxu0 %v25
    %51 = vmatprep.subr.mxu0 0.0
    %52 = vmatpush1.msra.mxu0 0.0
    %53 = vmatprep.subr.mxu0 0.0
    %54 = vmatpush1.msra.mxu0 0.0
    %55 = vmatprep.subr.mxu0 0.0
    %56 = vmatpush1.msra.mxu0 0.0
    %57 = vmatprep.subr.mxu0 0.0
    %58 = vmatpush1.msra.mxu0 0.0
    %59 = vmatprep.subr.mxu0 0.0
    %60 = vmatpush1.msra.mxu0 0.0
    %61 = vmatprep.subr.mxu0 0.0
    %62 = vmatpush1.msra.mxu0 0.0
    %63 = vmatprep.subr.mxu0 0.0
    %64 = vmatpush1.msra.mxu0 0.0
    %65 = vmatprep.subr.mxu0 0.0
    %66 = vmatpush1.msra.mxu0 0.0
    %67 = vmatprep.subr.mxu0 0.0
    %68 = vmatpush1.msra.mxu0 0.0
    %69 = vmatprep.subr.mxu0 0.0
    %70 = vmatpush1.msra.mxu0 0.0
    %71 = vmatprep.subr.mxu0 0.0
    %72 = vmatpush1.msra.mxu0 0.0
    %73 = vmatprep.subr.mxu0 0.0
    %74 = vmatpush1.msra.mxu0 0.0
    %75 = vmatprep.subr.mxu0 0.0
    %76 = vmatpush1.msra.mxu0 0.0
    %77 = vmatprep.subr.mxu0 0.0
    %78 = vmatpush1.msra.mxu0 0.0
    %79 = vmatprep.subr.mxu0 0.0
    %80 = vmatpush1.msra.mxu0 0.0
    %81 = vmatprep.subr.mxu0 0.0
    %82 = vmatpush1.msra.mxu0 0.0
    %83 = vmatprep.subr.mxu0 0.0
    %84 = vmatpush1.msra.mxu0 0.0
    %85 = vmatprep.subr.mxu0 0.0
    %86 = vmatpush1.msra.mxu0 0.0
    %87 = vmatprep.subr.mxu0 0.0
    %88 = vmatpush1.msra.mxu0 0.0
    %89 = vmatprep.subr.mxu0 0.0
    %90 = vmatpush1.msra.mxu0 0.0
    %91 = vmatprep.subr.mxu0 0.0
    %92 = vmatpush1.msra.mxu0 0.0
    %93 = vmatprep.subr.mxu0 0.0
    %94 = vmatpush1.msra.mxu0 0.0
    %95 = vmatprep.mubr.f32.mxu0 0.0
    %96 = vmatmul.mubr.f32.gmra.mrb[0].mxu0 %v29
    %v97 = vpop.f32.mrb[0].mxu0
    %v98 = vadd.f32 %v26, %v97
    %v99 = vpop.f32.mrb[0].mxu0
    %100 = vdwg.mxu0
    %vm101 = vcmask 122880
    %102 = vst.msk [vmem:[#allocation2] sm:$0x1] %vm101, %v98
    // Predicated region
    $region14: #{tpu_custom_call.1} parent=1 // pred_check
      _
    $region15: #{tpu_custom_call.1} parent=1 // pred_check_branch
      %104 = sbr.rel (0) target = $region17
    $region16: #{tpu_custom_call.1} parent=1 // pred_region
      %s106 = ssub.s32 16, 16
      %107 = vsyncadd [#allocation3], %s106
      %s109 = sshll.u32 [#allocation2], 4
      %s110 = int_to_ptr.vmem [resolvable:$true] %s109
      %112 = dma.vmem_to_hbm [thread:$0]  %s110, 16, %s3, [#allocation3]
    $region17: #{tpu_custom_call.1} parent=1 // pred_fallthru
      _
    // Predicated region
    $region18: #{tpu_custom_call.1} parent=1 // pred_check
      _
    $region19: #{tpu_custom_call.1} parent=1 // pred_check_branch
      %114 = sbr.rel (0) target = $region21
    $region20: #{tpu_custom_call.1} parent=1 // pred_region
      %115 = dma.done [#allocation3], 16
    $region21: #{tpu_custom_call.1} parent=1 // pred_fallthru
      _
    %116 = vsyncpa [#allocation3], 1

</llo_original>
